<compile_context>
chip_gen: v7x
topology: tpu7x:2x2x1
jax: 0.10.0
libtpu: 0.0.40
codegen_flags: <defaults>
</compile_context>

<pallas_src>
import jax
import jax.numpy as jnp
from jax.experimental import pallas as pl
from jax.experimental.pallas import tpu as pltpu


def _round_up(x, m):
    return ((x + m - 1) // m) * m


def _residual_linear_kernel(x_ref, w_ref, b_ref, o_ref):
    # x_ref: (TM, Hp)  w_ref: (Hp, Hp)  b_ref: (1, Hp)  o_ref: (TM, Hp)
    x = x_ref[...]
    y = jnp.dot(x, w_ref[...], preferred_element_type=jnp.float32)  # MXU
    y = y + b_ref[...].astype(jnp.float32) + x.astype(jnp.float32)  # VPU epilogue
    o_ref[...] = y.astype(o_ref.dtype)


def _residual_linear_kernel_ntiled(x_ref, xres_ref, w_ref, b_ref, o_ref):
    # x_ref: (TM, Hp)  xres_ref: (TM, TN)  w_ref: (Hp, TN)  b_ref: (1, TN)
    y = jnp.dot(x_ref[...], w_ref[...], preferred_element_type=jnp.float32)
    y = y + b_ref[...].astype(jnp.float32) + xres_ref[...].astype(jnp.float32)
    o_ref[...] = y.astype(o_ref.dtype)


def residual_add_linear(x, w, b, *, tm_max=512,
                        vmem_budget_bytes=32 * 1024 * 1024):
    """out = x @ w + b + x, fused in one Pallas kernel.

    x: (B, S, H) float32
    w: (H, H) laid out as (in, out)   (i.e. torch Linear weight transposed)
    b: (H,)
    """
    B, S, H = x.shape
    M = B * S

    # Lane-dense hidden dim (multiple of 128) and sublane-aligned row tile.
    H_pad = _round_up(H, 128)
    TM = min(_round_up(M, 8), _round_up(int(tm_max), 8))

    x2d = x.reshape(M, H)
    if H_pad != H:
        x2d = jnp.pad(x2d, ((0, 0), (0, H_pad - H)))
        w_p = jnp.pad(w, ((0, H_pad - H), (0, H_pad - H)))
        b_p = jnp.pad(b, (0, H_pad - H))
    else:
        w_p, b_p = w, b
    b_p = b_p.reshape(1, H_pad)

    n_m = pl.cdiv(M, TM)

    # Pick the output-column tile TN: full weight resident if it fits a
    # conservative (double-buffered, f32) VMEM budget, otherwise column strips.
    def _fits(tn, two_x):
        elems = (H_pad * tn          # weight tile
                 + TM * H_pad        # x tile (matmul operand)
                 + tn                # bias tile
                 + TM * tn           # output tile
                 + (TM * tn if two_x else 0))  # residual view of x
        return 2 * elems * 4 <= vmem_budget_bytes  # x2 double-buffering

    if _fits(H_pad, two_x=False):
        TN = H_pad
    else:
        cands = [c for c in (4096, 2048, 1024, 512, 256, 128) if c < H_pad]
        TN = next((c for c in cands if _fits(c, two_x=True)), 128)

    cost = pl.CostEstimate(
        flops=2 * M * H * H + 2 * M * H,
        transcendentals=0,
        bytes_accessed=x.dtype.itemsize * (2 * M * H + H * H + H),
    )

    if TN == H_pad:
        # Weight / bias fully VMEM-resident (constant index_map); x / out
        # stream over M with software-pipelined double buffering.
        out = pl.pallas_call(
            _residual_linear_kernel,
            out_shape=jax.ShapeDtypeStruct((M, H_pad), x.dtype),
            grid=(n_m,),
            in_specs=[
                pl.BlockSpec((TM, H_pad), lambda i: (i, 0)),     # x (tiled over M)
                pl.BlockSpec((H_pad, H_pad), lambda i: (0, 0)),  # w (resident)
                pl.BlockSpec((1, H_pad), lambda i: (0, 0)),      # b (resident)
            ],
            out_specs=pl.BlockSpec((TM, H_pad), lambda i: (i, 0)),
            compiler_params=pltpu.CompilerParams(
                dimension_semantics=("parallel",),
                vmem_limit_bytes=48 * 1024 * 1024,
            ),
            cost_estimate=cost,
        )(x2d, w_p, b_p)
    else:
        # Large hidden: tile weight into column strips.  N is the OUTER grid
        # axis so each weight strip stays resident across all inner M steps.
        n_n = pl.cdiv(H_pad, TN)
        out = pl.pallas_call(
            _residual_linear_kernel_ntiled,
            out_shape=jax.ShapeDtypeStruct((M, H_pad), x.dtype),
            grid=(n_n, n_m),
            in_specs=[
                pl.BlockSpec((TM, H_pad), lambda j, i: (i, 0)),  # x, full K (matmul)
                pl.BlockSpec((TM, TN), lambda j, i: (i, j)),     # x, N strip (residual)
                pl.BlockSpec((H_pad, TN), lambda j, i: (0, j)),  # weight column strip
                pl.BlockSpec((1, TN), lambda j, i: (0, j)),      # bias strip
            ],
            out_specs=pl.BlockSpec((TM, TN), lambda j, i: (i, j)),
            compiler_params=pltpu.CompilerParams(
                dimension_semantics=("parallel", "parallel"),
                vmem_limit_bytes=48 * 1024 * 1024,
            ),
            cost_estimate=cost,
        )(x2d, x2d, w_p, b_p)

    if H_pad != H:
        out = out[:, :H]
    return out.reshape(B, S, H)


def _check(B, S, H, key, **kwargs):
    kx, kw, kb = jax.random.split(key, 3)
    x = jax.random.normal(kx, (B, S, H), dtype=jnp.float32)
    w = jax.random.normal(kw, (H, H), dtype=jnp.float32) * 0.05
    b = jax.random.normal(kb, (H,), dtype=jnp.float32) * 0.05

    out = residual_add_linear(x, w, b, **kwargs)
    jax.block_until_ready(out)

    ref = jnp.dot(x, w, precision=jax.lax.Precision.HIGHEST) + b + x
    assert out.shape == ref.shape, f"shape mismatch {out.shape} vs {ref.shape}"
    assert jnp.allclose(out, ref, atol=1e-3, rtol=1e-3), (
        f"mismatch vs reference at (B,S,H)=({B},{S},{H})"
    )


if __name__ == "__main__":
    key = jax.random.PRNGKey(0)
    k1, k2, k3 = jax.random.split(key, 3)

    # Small canonical shape from the module spec: batch=2, seq=8, hidden=32.
    _check(2, 8, 32, k1)

    # Multiple M tiles with a ragged tail + H padding (300 rows, TM=128 ->
    # grid=(3,) with a masked last block; H=160 -> padded to 256 lanes).
    _check(3, 100, 160, k2, tm_max=128)

    # Force the N-tiled (weight-strip) path with a tiny VMEM budget, including
    # a ragged N edge block (H=384, TN=256 -> 2 column strips).
    _check(2, 64, 384, k3, tm_max=128, vmem_budget_bytes=2 * 1024 * 1024)

    print("KERNEL_OK")
</pallas_src>

<mosaic_0001>
module attributes {stable_mosaic.version = 11 : i64} {
  func.func @_residual_linear_kernel(%arg0: i32, %arg1: memref<16x128xf32, #tpu.memory_space<vmem>>, %arg2: memref<128x128xf32, #tpu.memory_space<vmem>>, %arg3: memref<1x128xf32, #tpu.memory_space<vmem>>, %arg4: memref<16x128xf32, #tpu.memory_space<vmem>>) attributes {dimension_semantics = [#tpu.dimension_semantics<parallel>], iteration_bounds = array<i64: 1>, scalar_prefetch = 0 : i64, scratch_operands = 0 : i64, tpu.core_type = #tpu.core_type<tc>, window_params = [{transform_indices = @transform_0, window_bounds = array<i64: 16, 128>}, {pipeline_mode = #tpu.pipeline_mode<synchronous>, transform_indices = @transform_1, window_bounds = array<i64: 128, 128>}, {pipeline_mode = #tpu.pipeline_mode<synchronous>, transform_indices = @transform_2, window_bounds = array<i64: 1, 128>}, {transform_indices = @transform_3, window_bounds = array<i64: 16, 128>}]} {
    %c0 = arith.constant 0 : index
    %c0_0 = arith.constant 0 : index
    %0 = vector.load %arg1[%c0, %c0_0] : memref<16x128xf32, #tpu.memory_space<vmem>>, vector<16x128xf32>
    %c0_1 = arith.constant 0 : index
    %c0_2 = arith.constant 0 : index
    %1 = vector.load %arg2[%c0_1, %c0_2] : memref<128x128xf32, #tpu.memory_space<vmem>>, vector<128x128xf32>
    %cst = arith.constant dense<0.000000e+00> : vector<16x128xf32>
    %2 = tpu.matmul %0, %1, %cst {dimension_numbers = #tpu.dot_dimension_numbers<[1], [0], [0], [1], [0, 0, 1, 1], [], []>} : vector<16x128xf32>, vector<128x128xf32>, vector<16x128xf32> -> vector<16x128xf32>
    %c0_3 = arith.constant 0 : index
    %c0_4 = arith.constant 0 : index
    %3 = vector.load %arg3[%c0_3, %c0_4] : memref<1x128xf32, #tpu.memory_space<vmem>>, vector<1x128xf32>
    %4 = vector.broadcast %3 : vector<1x128xf32> to vector<16x128xf32>
    %5 = arith.addf %2, %4 : vector<16x128xf32>
    %6 = arith.addf %5, %0 : vector<16x128xf32>
    %c0_5 = arith.constant 0 : index
    %c0_6 = arith.constant 0 : index
    %7 = vector.load %arg4[%c0_5, %c0_6] : memref<16x128xf32, #tpu.memory_space<vmem>>, vector<16x128xf32>
    tpu.vector_store %arg4[%c0_5, %c0_6], %6 {strides = array<i32>} : memref<16x128xf32, #tpu.memory_space<vmem>>, vector<16x128xf32>,
    return
  }
  func.func @transform_0(%arg0: i32) -> (i32, i32) {
    %c0_i32 = arith.constant 0 : i32
    %c0_i32_0 = arith.constant 0 : i32
    return %arg0, %c0_i32 : i32, i32
  }
  func.func @transform_1(%arg0: i32) -> (i32, i32) {
    %c0_i32 = arith.constant 0 : i32
    %c0_i32_0 = arith.constant 0 : i32
    %c0_i32_1 = arith.constant 0 : i32
    return %c0_i32, %c0_i32_0 : i32, i32
  }
  func.func @transform_2(%arg0: i32) -> (i32, i32) {
    %c0_i32 = arith.constant 0 : i32
    %c0_i32_0 = arith.constant 0 : i32
    %c0_i32_1 = arith.constant 0 : i32
    return %c0_i32, %c0_i32_0 : i32, i32
  }
  func.func @transform_3(%arg0: i32) -> (i32, i32) {
    %c0_i32 = arith.constant 0 : i32
    %c0_i32_0 = arith.constant 0 : i32
    return %arg0, %c0_i32 : i32, i32
  }
}

</mosaic_0001>

<llo_original>
// kernel: tpu_custom_call.1
$region0: #{tpu_custom_call.1}
  #allocation0 [shape = 'u32[]', space=smem, size = 0x4, offset = 0x4, fixed_abs, tag = 'smem constant byte address 0x4 - core index']
  #allocation1 [shape = 'u32[144,128]{1,0:T(1,128)}', space=vmem, size = 0x12000, scoped, tag = 'internal scratch']
  %s0 = inlined_call_operand.hbm [shape: f32[16,128], index: 0, kind: input, shape index: {}]
  %s1 = inlined_call_operand.hbm [shape: f32[128,128], index: 1, kind: input, shape index: {}]
  %s2 = inlined_call_operand.vmem [shape: f32[1,128], index: 2, kind: input, shape index: {}]
  %s3 = inlined_call_operand.hbm [shape: f32[16,128], index: 3, kind: output, shape index: {}]
  %s4 = sld [smem:[#allocation0]]
  $region30: #{tpu_custom_call.1} parent=0
    _
  %s6 = ssub.s32 1, %s4
  %s7 = scalar_select 0, %s6, %s4
  $region1: #{tpu_custom_call.1} parent=0
    #allocation2 [shape = 'u8[8192]{0}', space=vmem, size = 0x2000, scoped, tag = 'input window, operand 0, single buffered']
    #allocation3 [shape = 's32[1]{0}', space=sflag, size = 0x4, scoped, tag = 'scoped memory for tpu_custom_call.1']
    #allocation4 [shape = 's32[1]{0}', space=sflag, size = 0x4, scoped, tag = 'scoped memory for tpu_custom_call.1']
    #allocation5 [shape = 'u8[65536]{0}', space=vmem, size = 0x10000, scoped, tag = 'input window, operand 1, single buffered']
    #allocation6 [shape = 's32[1]{0}', space=sflag, size = 0x4, scoped, tag = 'scoped memory for tpu_custom_call.1']
    #allocation7 [shape = 'u8[8192]{0}', space=vmem, size = 0x2000, scoped, tag = 'output window, operand 0, single buffered']
    %8 = vsyncpa [#allocation3], 0
    %9 = vsyncpa [#allocation6], 0
    %10 = vsyncpa [#allocation4], 0
    // Predicated region
    $region2: #{tpu_custom_call.1} parent=1 // pred_check
      _
    $region3: #{tpu_custom_call.1} parent=1 // pred_check_branch
      %12 = sbr.rel (0) target = $region5
    $region4: #{tpu_custom_call.1} parent=1 // pred_region
      %s14 = ssub.s32 256, 256
      %15 = vsyncadd [#allocation3], %s14
      %s16 = sshll.u32 [#allocation2], 4
      %s17 = int_to_ptr.vmem [resolvable:$true] %s16
      %22 = dma.hbm_to_vmem [thread:$0]  %s0, 256, %s17, [#allocation3], 128, 128, 8
    $region5: #{tpu_custom_call.1} parent=1 // pred_fallthru
      _
    // Predicated region
    $region6: #{tpu_custom_call.1} parent=1 // pred_check
      _
    $region7: #{tpu_custom_call.1} parent=1 // pred_check_branch
      %24 = sbr.rel (0) target = $region9
    $region8: #{tpu_custom_call.1} parent=1 // pred_region
      %s26 = ssub.s32 2048, 2048
      %27 = vsyncadd [#allocation6], %s26
      %s28 = sshll.u32 [#allocation5], 4
      %s29 = int_to_ptr.vmem [resolvable:$true] %s28
      %34 = dma.hbm_to_vmem [thread:$0]  %s1, 2048, %s29, [#allocation6], 128, 128, 8
    $region9: #{tpu_custom_call.1} parent=1 // pred_fallthru
      _
    // Predicated region
    $region10: #{tpu_custom_call.1} parent=1 // pred_check
      _
    $region11: #{tpu_custom_call.1} parent=1 // pred_check_branch
      %36 = sbr.rel (0) target = $region13
    $region12: #{tpu_custom_call.1} parent=1 // pred_region
      _
    $region13: #{tpu_custom_call.1} parent=1 // pred_fallthru
      _
    // Predicated region
    $region14: #{tpu_custom_call.1} parent=1 // pred_check
      _
    $region15: #{tpu_custom_call.1} parent=1 // pred_check_branch
      %38 = sbr.rel (0) target = $region17
    $region16: #{tpu_custom_call.1} parent=1 // pred_region
      %39 = dma.done [#allocation3], 256
    $region17: #{tpu_custom_call.1} parent=1 // pred_fallthru
      _
    // Predicated region
    $region18: #{tpu_custom_call.1} parent=1 // pred_check
      _
    $region19: #{tpu_custom_call.1} parent=1 // pred_check_branch
      %41 = sbr.rel (0) target = $region21
    $region20: #{tpu_custom_call.1} parent=1 // pred_region
      %42 = dma.done [#allocation6], 2048
    $region21: #{tpu_custom_call.1} parent=1 // pred_fallthru
      _
    %v43 = vld [vmem:[#allocation2] sm:$0xff]
    %v44 = vld [vmem:[#allocation2 + $0x8] sm:$0xff]
    %v45 = vld [vmem:[#allocation5] sm:$0xff]
    %v46 = vld [vmem:[#allocation5 + $0x8] sm:$0xff]
    %v47 = vld [vmem:[#allocation5 + $0x10] sm:$0xff]
    %v48 = vld [vmem:[#allocation5 + $0x18] sm:$0xff]
    %v49 = vld [vmem:[#allocation5 + $0x20] sm:$0xff]
    %v50 = vld [vmem:[#allocation5 + $0x28] sm:$0xff]
    %v51 = vld [vmem:[#allocation5 + $0x30] sm:$0xff]
    %v52 = vld [vmem:[#allocation5 + $0x38] sm:$0xff]
    %v53 = vld [vmem:[#allocation5 + $0x40] sm:$0xff]
    %v54 = vld [vmem:[#allocation5 + $0x48] sm:$0xff]
    %v55 = vld [vmem:[#allocation5 + $0x50] sm:$0xff]
    %v56 = vld [vmem:[#allocation5 + $0x58] sm:$0xff]
    %v57 = vld [vmem:[#allocation5 + $0x60] sm:$0xff]
    %v58 = vld [vmem:[#allocation5 + $0x68] sm:$0xff]
    %v59 = vld [vmem:[#allocation5 + $0x70] sm:$0xff]
    %v60 = vld [vmem:[#allocation5 + $0x78] sm:$0xff]
    %v61 = vld [vmem:[%s2] sm:$0x1]
    %v63 = vlaneseq
    %v64 = vshrl.u32 %v63, 7
    %v65 = vsub.s32 0, %v64
    %v66 = vrot.slane %v61, %v65
    %68 = vmatprep.subr.mxu0 0.0
    %69 = vmatpush1.msra.mxu0 %v45
    %70 = vmatprep.subr.mxu0 0.0
    %71 = vmatpush1.msra.mxu0 %v46
    %72 = vmatprep.subr.mxu0 0.0
    %73 = vmatpush1.msra.mxu0 %v47
    %74 = vmatprep.subr.mxu0 0.0
    %75 = vmatpush1.msra.mxu0 %v48
    %76 = vmatprep.subr.mxu0 0.0
    %77 = vmatpush1.msra.mxu0 %v49
    %78 = vmatprep.subr.mxu0 0.0
    %79 = vmatpush1.msra.mxu0 %v50
    %80 = vmatprep.subr.mxu0 0.0
    %81 = vmatpush1.msra.mxu0 %v51
    %82 = vmatprep.subr.mxu0 0.0
    %83 = vmatpush1.msra.mxu0 %v52
    %84 = vmatprep.subr.mxu0 0.0
    %85 = vmatpush1.msra.mxu0 %v53
    %86 = vmatprep.subr.mxu0 0.0
    %87 = vmatpush1.msra.mxu0 %v54
    %88 = vmatprep.subr.mxu0 0.0
    %89 = vmatpush1.msra.mxu0 %v55
    %90 = vmatprep.subr.mxu0 0.0
    %91 = vmatpush1.msra.mxu0 %v56
    %92 = vmatprep.subr.mxu0 0.0
    %93 = vmatpush1.msra.mxu0 %v57
    %94 = vmatprep.subr.mxu0 0.0
    %95 = vmatpush1.msra.mxu0 %v58
    %96 = vmatprep.subr.mxu0 0.0
    %97 = vmatpush1.msra.mxu0 %v59
    %98 = vmatprep.subr.mxu0 0.0
    %99 = vmatpush1.msra.mxu0 %v60
    %100 = vmatprep.subr.mxu0 0.0
    %101 = vmatpush1.msra.mxu0 0.0
    %102 = vmatprep.subr.mxu0 0.0
    %103 = vmatpush1.msra.mxu0 0.0
    %104 = vmatprep.subr.mxu0 0.0
    %105 = vmatpush1.msra.mxu0 0.0
    %106 = vmatprep.subr.mxu0 0.0
    %107 = vmatpush1.msra.mxu0 0.0
    %108 = vmatprep.subr.mxu0 0.0
    %109 = vmatpush1.msra.mxu0 0.0
    %110 = vmatprep.subr.mxu0 0.0
    %111 = vmatpush1.msra.mxu0 0.0
    %112 = vmatprep.subr.mxu0 0.0
    %113 = vmatpush1.msra.mxu0 0.0
    %114 = vmatprep.subr.mxu0 0.0
    %115 = vmatpush1.msra.mxu0 0.0
    %116 = vmatprep.subr.mxu0 0.0
    %117 = vmatpush1.msra.mxu0 0.0
    %118 = vmatprep.subr.mxu0 0.0
    %119 = vmatpush1.msra.mxu0 0.0
    %120 = vmatprep.subr.mxu0 0.0
    %121 = vmatpush1.msra.mxu0 0.0
    %122 = vmatprep.subr.mxu0 0.0
    %123 = vmatpush1.msra.mxu0 0.0
    %124 = vmatprep.subr.mxu0 0.0
    %125 = vmatpush1.msra.mxu0 0.0
    %126 = vmatprep.subr.mxu0 0.0
    %127 = vmatpush1.msra.mxu0 0.0
    %128 = vmatprep.subr.mxu0 0.0
    %129 = vmatpush1.msra.mxu0 0.0
    %130 = vmatprep.subr.mxu0 0.0
    %131 = vmatpush1.msra.mxu0 0.0
    %132 = vmatprep.mubr.f32.mxu0 0.0
    %133 = vmatmul.mubr.f32.gmra.mrb[0].mxu0 %v43
    %v134 = vpop.f32.mrb[0].mxu0
    %v135 = vadd.f32 %v66, %v134
    %v136 = vpop.f32.mrb[0].mxu0
    %137 = vmatprep.mubr.f32.mxu0 0.0
    %138 = vmatmul.mubr.f32.gmra.mrb[0].mxu0 %v44
    %v139 = vpop.f32.mrb[0].mxu0
    %v140 = vadd.f32 %v66, %v139
    %v141 = vpop.f32.mrb[0].mxu0
    %142 = vdwg.mxu0
    %v143 = vadd.f32 %v135, %v43
    %v144 = vadd.f32 %v140, %v44
    %145 = vst [vmem:[#allocation7] sm:$0xff] %v143
    %146 = vst [vmem:[#allocation7 + $0x8] sm:$0xff] %v144
    // Predicated region
    $region22: #{tpu_custom_call.1} parent=1 // pred_check
      _
    $region23: #{tpu_custom_call.1} parent=1 // pred_check_branch
      %148 = sbr.rel (0) target = $region25
    $region24: #{tpu_custom_call.1} parent=1 // pred_region
      %s150 = ssub.s32 256, 256
      %151 = vsyncadd [#allocation4], %s150
      %s152 = sshll.u32 [#allocation7], 4
      %s153 = int_to_ptr.vmem [resolvable:$true] %s152
      %158 = dma.vmem_to_hbm [thread:$0]  %s153, 256, %s3, [#allocation4], 128, 128, 8
    $region25: #{tpu_custom_call.1} parent=1 // pred_fallthru
      _
    // Predicated region
    $region26: #{tpu_custom_call.1} parent=1 // pred_check
      _
    $region27: #{tpu_custom_call.1} parent=1 // pred_check_branch
      %160 = sbr.rel (0) target = $region29
    $region28: #{tpu_custom_call.1} parent=1 // pred_region
      %161 = dma.done [#allocation4], 256
    $region29: #{tpu_custom_call.1} parent=1 // pred_fallthru
      _
    %162 = vsyncpa [#allocation3], 1
    %163 = vsyncpa [#allocation6], 1
    %164 = vsyncpa [#allocation4], 1

</llo_original>
